<compile_context>
chip_gen: v7x
topology: tpu7x:2x2x1
jax: 0.10.0
libtpu: 0.0.40
codegen_flags: <defaults>
</compile_context>

<pallas_src>
import functools
import math

import jax
import jax.numpy as jnp
from jax.experimental import pallas as pl
from jax.experimental.pallas import tpu as pltpu


def _fields_addition_kernel(*refs, num_fields: int, prefactor: float):
    """refs = (in_0, ..., in_{K-1}, out). Sum inputs elementwise, scale."""
    in_refs = refs[:num_fields]
    out_ref = refs[num_fields]

    acc_dtype = jnp.float32
    x = in_refs[0][...]
    acc = x if x.dtype == acc_dtype else x.astype(acc_dtype)
    for r in in_refs[1:]:
        y = r[...]
        acc = acc + (y if y.dtype == acc_dtype else y.astype(acc_dtype))
    out_ref[...] = (acc * prefactor).astype(out_ref.dtype)


def fields_addition(
    fields,
    *,
    normalization: bool = True,
    lane_width: int = 512,
    vmem_budget_bytes: int = 24 * 1024 * 1024,
):
    """Pallas implementation of FieldsAddition.forward.

    Args:
      fields: list of K arrays, all of identical shape and dtype.
      normalization: if True, prefactor = 1/K, else 1 (matches the module).
      lane_width: lane-dense last dim used internally (multiple of 128).
      vmem_budget_bytes: budget for the 2*(K+1) pipelined tile buffers; kept
        conservative so it also fits v7x's 64 MiB VMEM.
    Returns:
      Array with the shape/dtype of fields[0]: (sum of fields) * prefactor.
    """
    num_fields = len(fields)
    x0 = fields[0]
    for f in fields[1:]:
        assert f.shape == x0.shape and f.dtype == x0.dtype, (
            "Irreps not given for all input fields."  # mirror the module's check
        )
    orig_shape = x0.shape
    dtype = x0.dtype
    itemsize = jnp.dtype(dtype).itemsize
    prefactor = (1.0 / num_fields) if normalization else 1.0

    assert lane_width % 128 == 0, "lane_width must be a multiple of 128"
    # Sublane granularity: 8 rows for 32-bit, 16 for 16-bit, 32 for 8-bit.
    sublane = max(8, 32 // itemsize)

    total = math.prod(orig_shape)
    rows = max(1, pl.cdiv(total, lane_width))

    # Derive the row tile from the VMEM budget: double-buffered K inputs + 1 out.
    n_buffers = 2 * (num_fields + 1)
    tile_bytes = max(1, vmem_budget_bytes // n_buffers)
    row_tile = tile_bytes // (lane_width * itemsize)
    row_tile = max(sublane, (row_tile // sublane) * sublane)

    # Don't make the tile larger than the (sublane-rounded) data.
    rows_rounded = pl.cdiv(rows, sublane) * sublane
    row_tile = min(row_tile, rows_rounded)

    # If the data is large, keep at least a few grid steps so the "parallel"
    # axis can shard across v7x's two TensorCores.
    min_steps = 4
    if rows_rounded >= min_steps * sublane and pl.cdiv(rows_rounded, row_tile) < min_steps:
        row_tile = max(sublane, ((rows_rounded // min_steps) // sublane) * sublane)

    padded_rows = pl.cdiv(rows, row_tile) * row_tile
    padded_total = padded_rows * lane_width
    grid = padded_rows // row_tile

    def to_lane_dense(x):
        flat = x.reshape(-1)
        pad = padded_total - total
        if pad:
            flat = jnp.pad(flat, (0, pad))
        return flat.reshape(padded_rows, lane_width)

    xs = [to_lane_dense(f) for f in fields]

    kernel = functools.partial(
        _fields_addition_kernel, num_fields=num_fields, prefactor=prefactor
    )

    block = pl.BlockSpec((row_tile, lane_width), lambda i: (i, 0))
    pipelined_bytes = n_buffers * row_tile * lane_width * itemsize
    vmem_limit = min(56 * 1024 * 1024, pipelined_bytes + 8 * 1024 * 1024)

    out = pl.pallas_call(
        kernel,
        out_shape=jax.ShapeDtypeStruct((padded_rows, lane_width), dtype),
        grid_spec=pltpu.PrefetchScalarGridSpec(
            num_scalar_prefetch=0,
            grid=(grid,),
            in_specs=[block for _ in range(num_fields)],
            out_specs=block,
        ),
        compiler_params=pltpu.CompilerParams(
            dimension_semantics=("parallel",),
            vmem_limit_bytes=int(vmem_limit),
        ),
    )(*xs)

    return out.reshape(-1)[:total].reshape(orig_shape)


if __name__ == "__main__":
    key = jax.random.PRNGKey(0)

    # Case 1: 3 input fields (e.g. "node_features_a/b/c") with irreps
    # "4x0e + 4x1o" -> dim = 4*1 + 4*3 = 16, over N = 32 nodes, f32.
    num_fields = 3
    n_nodes, irreps_dim = 32, 16
    keys = jax.random.split(key, num_fields)
    fields = [
        jax.random.normal(k, (n_nodes, irreps_dim), dtype=jnp.float32)
        for k in keys
    ]
    out = jax.block_until_ready(fields_addition(fields, normalization=True))
    ref = jnp.sum(jnp.stack(fields, axis=0), axis=0) * (1.0 / num_fields)
    assert out.shape == (n_nodes, irreps_dim)
    assert out.dtype == fields[0].dtype
    assert jnp.allclose(out, ref, atol=1e-6, rtol=1e-6)

    # Case 2: ragged shape (N not a multiple of anything nice) + no normalization,
    # exercising the pad/crop path.
    num_fields2 = 4
    n2, d2 = 37, 24
    keys2 = jax.random.split(jax.random.PRNGKey(1), num_fields2)
    fields2 = [
        jax.random.normal(k, (n2, d2), dtype=jnp.float32) for k in keys2
    ]
    out2 = jax.block_until_ready(fields_addition(fields2, normalization=False))
    ref2 = jnp.sum(jnp.stack(fields2, axis=0), axis=0)
    assert out2.shape == (n2, d2)
    assert jnp.allclose(out2, ref2, atol=1e-5, rtol=1e-5)

    print("KERNEL_OK")
</pallas_src>

<mosaic_0001>
module attributes {stable_mosaic.version = 11 : i64} {
  func.func @_fields_addition_kernel(%arg0: i32, %arg1: memref<8x512xf32, #tpu.memory_space<vmem>>, %arg2: memref<8x512xf32, #tpu.memory_space<vmem>>, %arg3: memref<8x512xf32, #tpu.memory_space<vmem>>, %arg4: memref<8x512xf32, #tpu.memory_space<vmem>>) attributes {dimension_semantics = [#tpu.dimension_semantics<parallel>], iteration_bounds = array<i64: 1>, scalar_prefetch = 0 : i64, scratch_operands = 0 : i64, tpu.core_type = #tpu.core_type<tc>, window_params = [{transform_indices = @transform_0, window_bounds = array<i64: 8, 512>}, {transform_indices = @transform_1, window_bounds = array<i64: 8, 512>}, {transform_indices = @transform_2, window_bounds = array<i64: 8, 512>}, {transform_indices = @transform_3, window_bounds = array<i64: 8, 512>}]} {
    %c0 = arith.constant 0 : index
    %c0_0 = arith.constant 0 : index
    %0 = vector.load %arg1[%c0, %c0_0] : memref<8x512xf32, #tpu.memory_space<vmem>>, vector<8x512xf32>
    %c0_1 = arith.constant 0 : index
    %c0_2 = arith.constant 0 : index
    %1 = vector.load %arg2[%c0_1, %c0_2] : memref<8x512xf32, #tpu.memory_space<vmem>>, vector<8x512xf32>
    %2 = arith.addf %0, %1 : vector<8x512xf32>
    %c0_3 = arith.constant 0 : index
    %c0_4 = arith.constant 0 : index
    %3 = vector.load %arg3[%c0_3, %c0_4] : memref<8x512xf32, #tpu.memory_space<vmem>>, vector<8x512xf32>
    %4 = arith.addf %2, %3 : vector<8x512xf32>
    %cst = arith.constant 0.333333343 : f32
    %5 = vector.broadcast %cst : f32 to vector<8x512xf32>
    %6 = arith.mulf %4, %5 : vector<8x512xf32>
    %c0_5 = arith.constant 0 : index
    %c0_6 = arith.constant 0 : index
    %7 = vector.load %arg4[%c0_5, %c0_6] : memref<8x512xf32, #tpu.memory_space<vmem>>, vector<8x512xf32>
    tpu.vector_store %arg4[%c0_5, %c0_6], %6 {strides = array<i32>} : memref<8x512xf32, #tpu.memory_space<vmem>>, vector<8x512xf32>,
    return
  }
  func.func @transform_0(%arg0: i32) -> (i32, i32) {
    %c0_i32 = arith.constant 0 : i32
    %c0_i32_0 = arith.constant 0 : i32
    return %arg0, %c0_i32 : i32, i32
  }
  func.func @transform_1(%arg0: i32) -> (i32, i32) {
    %c0_i32 = arith.constant 0 : i32
    %c0_i32_0 = arith.constant 0 : i32
    return %arg0, %c0_i32 : i32, i32
  }
  func.func @transform_2(%arg0: i32) -> (i32, i32) {
    %c0_i32 = arith.constant 0 : i32
    %c0_i32_0 = arith.constant 0 : i32
    return %arg0, %c0_i32 : i32, i32
  }
  func.func @transform_3(%arg0: i32) -> (i32, i32) {
    %c0_i32 = arith.constant 0 : i32
    %c0_i32_0 = arith.constant 0 : i32
    return %arg0, %c0_i32 : i32, i32
  }
}

</mosaic_0001>

<llo_original>
// kernel: tpu_custom_call.1
$region0: #{tpu_custom_call.1}
  #allocation0 [shape = 'u32[]', space=smem, size = 0x4, offset = 0x4, fixed_abs, tag = 'smem constant byte address 0x4 - core index']
  #allocation1 [shape = 'u32[144,128]{1,0:T(1,128)}', space=vmem, size = 0x12000, scoped, tag = 'internal scratch']
  %s0 = inlined_call_operand.hbm [shape: f32[8,512], index: 0, kind: input, shape index: {}]
  %s1 = inlined_call_operand.hbm [shape: f32[8,512], index: 1, kind: input, shape index: {}]
  %s2 = inlined_call_operand.hbm [shape: f32[8,512], index: 2, kind: input, shape index: {}]
  %s3 = inlined_call_operand.hbm [shape: f32[8,512], index: 3, kind: output, shape index: {}]
  %s4 = sld [smem:[#allocation0]]
  $region34: #{tpu_custom_call.1} parent=0
    _
  %s6 = ssub.s32 1, %s4
  %s7 = scalar_select 0, %s6, %s4
  $region1: #{tpu_custom_call.1} parent=0
    #allocation2 [shape = 'u8[16384]{0}', space=vmem, size = 0x4000, scoped, tag = 'input window, operand 0, single buffered']
    #allocation3 [shape = 's32[1]{0}', space=sflag, size = 0x4, scoped, tag = 'scoped memory for tpu_custom_call.1']
    #allocation4 [shape = 's32[1]{0}', space=sflag, size = 0x4, scoped, tag = 'scoped memory for tpu_custom_call.1']
    #allocation5 [shape = 'u8[16384]{0}', space=vmem, size = 0x4000, scoped, tag = 'input window, operand 1, single buffered']
    #allocation6 [shape = 's32[1]{0}', space=sflag, size = 0x4, scoped, tag = 'scoped memory for tpu_custom_call.1']
    #allocation7 [shape = 'u8[16384]{0}', space=vmem, size = 0x4000, scoped, tag = 'input window, operand 2, single buffered']
    #allocation8 [shape = 'u8[16384]{0}', space=vmem, size = 0x4000, scoped, tag = 'output window, operand 0, single buffered']
    %8 = vsyncpa [#allocation3], 0
    %9 = vsyncpa [#allocation6], 0
    %10 = vsyncpa [#allocation4], 0
    // Predicated region
    $region2: #{tpu_custom_call.1} parent=1 // pred_check
      _
    $region3: #{tpu_custom_call.1} parent=1 // pred_check_branch
      %12 = sbr.rel (0) target = $region5
    $region4: #{tpu_custom_call.1} parent=1 // pred_region
      %s14 = ssub.s32 512, 512
      %15 = vsyncadd [#allocation3], %s14
      %s17 = sshll.u32 [#allocation2], 4
      %s18 = int_to_ptr.vmem [resolvable:$true] %s17
      %20 = dma.hbm_to_vmem [thread:$0]  %s0, 512, %s18, [#allocation3]
    $region5: #{tpu_custom_call.1} parent=1 // pred_fallthru
      _
    // Predicated region
    $region6: #{tpu_custom_call.1} parent=1 // pred_check
      _
    $region7: #{tpu_custom_call.1} parent=1 // pred_check_branch
      %22 = sbr.rel (0) target = $region9
    $region8: #{tpu_custom_call.1} parent=1 // pred_region
      %s24 = ssub.s32 512, 512
      %25 = vsyncadd [#allocation6], %s24
      %s27 = sshll.u32 [#allocation5], 4
      %s28 = int_to_ptr.vmem [resolvable:$true] %s27
      %30 = dma.hbm_to_vmem [thread:$0]  %s1, 512, %s28, [#allocation6]
    $region9: #{tpu_custom_call.1} parent=1 // pred_fallthru
      _
    // Predicated region
    $region10: #{tpu_custom_call.1} parent=1 // pred_check
      _
    $region11: #{tpu_custom_call.1} parent=1 // pred_check_branch
      %32 = sbr.rel (0) target = $region13
    $region12: #{tpu_custom_call.1} parent=1 // pred_region
      %s34 = ssub.s32 512, 512
      %35 = vsyncadd [#allocation6], %s34
      %s37 = sshll.u32 [#allocation7], 4
      %s38 = int_to_ptr.vmem [resolvable:$true] %s37
      %40 = dma.hbm_to_vmem [thread:$0]  %s2, 512, %s38, [#allocation6]
    $region13: #{tpu_custom_call.1} parent=1 // pred_fallthru
      _
    // Predicated region
    $region14: #{tpu_custom_call.1} parent=1 // pred_check
      _
    $region15: #{tpu_custom_call.1} parent=1 // pred_check_branch
      %42 = sbr.rel (0) target = $region17
    $region16: #{tpu_custom_call.1} parent=1 // pred_region
      %43 = dma.done [#allocation3], 512
    $region17: #{tpu_custom_call.1} parent=1 // pred_fallthru
      _
    // Predicated region
    $region18: #{tpu_custom_call.1} parent=1 // pred_check
      _
    $region19: #{tpu_custom_call.1} parent=1 // pred_check_branch
      %45 = sbr.rel (0) target = $region21
    $region20: #{tpu_custom_call.1} parent=1 // pred_region
      %46 = dma.done [#allocation6], 512
    $region21: #{tpu_custom_call.1} parent=1 // pred_fallthru
      _
    // Predicated region
    $region22: #{tpu_custom_call.1} parent=1 // pred_check
      _
    $region23: #{tpu_custom_call.1} parent=1 // pred_check_branch
      %48 = sbr.rel (0) target = $region25
    $region24: #{tpu_custom_call.1} parent=1 // pred_region
      %49 = dma.done [#allocation6], 512
    $region25: #{tpu_custom_call.1} parent=1 // pred_fallthru
      _
    %v50 = vld [vmem:[#allocation2] sm:$0xff]
    %v51 = vld [vmem:[#allocation2 + $0x8] sm:$0xff]
    %v52 = vld [vmem:[#allocation2 + $0x10] sm:$0xff]
    %v53 = vld [vmem:[#allocation2 + $0x18] sm:$0xff]
    %v54 = vld [vmem:[#allocation5] sm:$0xff]
    %v55 = vld [vmem:[#allocation5 + $0x8] sm:$0xff]
    %v56 = vld [vmem:[#allocation5 + $0x10] sm:$0xff]
    %v57 = vld [vmem:[#allocation5 + $0x18] sm:$0xff]
    %v58 = vadd.f32 %v50, %v54
    %v59 = vadd.f32 %v51, %v55
    %v60 = vadd.f32 %v52, %v56
    %v61 = vadd.f32 %v53, %v57
    %v62 = vld [vmem:[#allocation7] sm:$0xff]
    %v63 = vld [vmem:[#allocation7 + $0x8] sm:$0xff]
    %v64 = vld [vmem:[#allocation7 + $0x10] sm:$0xff]
    %v65 = vld [vmem:[#allocation7 + $0x18] sm:$0xff]
    %v66 = vadd.f32 %v58, %v62
    %v67 = vadd.f32 %v59, %v63
    %v68 = vadd.f32 %v60, %v64
    %v69 = vadd.f32 %v61, %v65
    %v70 = vmul.f32 %v66, 0.33333334
    %v71 = vmul.f32 %v67, 0.33333334
    %v72 = vmul.f32 %v68, 0.33333334
    %v73 = vmul.f32 %v69, 0.33333334
    %74 = vst [vmem:[#allocation8] sm:$0xff] %v70
    %75 = vst [vmem:[#allocation8 + $0x8] sm:$0xff] %v71
    %76 = vst [vmem:[#allocation8 + $0x10] sm:$0xff] %v72
    %77 = vst [vmem:[#allocation8 + $0x18] sm:$0xff] %v73
    // Predicated region
    $region26: #{tpu_custom_call.1} parent=1 // pred_check
      _
    $region27: #{tpu_custom_call.1} parent=1 // pred_check_branch
      %79 = sbr.rel (0) target = $region29
    $region28: #{tpu_custom_call.1} parent=1 // pred_region
      %s81 = ssub.s32 512, 512
      %82 = vsyncadd [#allocation4], %s81
      %s84 = sshll.u32 [#allocation8], 4
      %s85 = int_to_ptr.vmem [resolvable:$true] %s84
      %87 = dma.vmem_to_hbm [thread:$0]  %s85, 512, %s3, [#allocation4]
    $region29: #{tpu_custom_call.1} parent=1 // pred_fallthru
      _
    // Predicated region
    $region30: #{tpu_custom_call.1} parent=1 // pred_check
      _
    $region31: #{tpu_custom_call.1} parent=1 // pred_check_branch
      %89 = sbr.rel (0) target = $region33
    $region32: #{tpu_custom_call.1} parent=1 // pred_region
      %90 = dma.done [#allocation4], 512
    $region33: #{tpu_custom_call.1} parent=1 // pred_fallthru
      _
    %91 = vsyncpa [#allocation3], 1
    %92 = vsyncpa [#allocation6], 1
    %93 = vsyncpa [#allocation4], 1

</llo_original>
